<compile_context>
chip_gen: v7x
topology: tpu7x:2x2x1
jax: 0.10.0
libtpu: 0.0.40
codegen_flags: <defaults>
</compile_context>

<pallas_src>
import functools

import numpy as np
import jax
import jax.numpy as jnp
from jax.experimental import pallas as pl
from jax.experimental.pallas import tpu as pltpu


def _pick_batch_block(n, h_out, target_m=256):
    """Largest divisor of n with b*h_out <~ target_m, keeping >=2 grid steps when n >= 2."""
    cap = max(1, target_m // max(1, h_out))
    divisors = [b for b in range(1, n + 1) if n % b == 0 and b <= cap]
    if n >= 2:
        two_step = [b for b in divisors if n // b >= 2]
        if two_step:
            return max(two_step)
    return max(divisors)


def _convblock_kernel(x_ref, w_ref, s_ref, b_ref, *rest,
                      b_blk, kh, stride, pad, h_out, w_out, c_out, k_pad,
                      skip, skip_map):
    if skip and skip_map:
        r_ref, out_ref = rest
    else:
        (out_ref,) = rest

    wcin = x_ref.shape[2]                      # W * C_in
    span = stride * (h_out - 1) + 1
    n_cols = w_out * c_out

    # Build the (B_blk*h_out, K) LHS: per image, synthesize the vertical zero halo in VMEM,
    # take the kh row-shifted tap slabs and concatenate them along lanes -> one full-K stream.
    lhs_parts = []
    ident_parts = []
    for b in range(b_blk):
        xb = x_ref[b]                                                    # (H, W*C_in) bf16
        if pad > 0:
            zrow = jnp.zeros((pad, wcin), xb.dtype)
            xp = jnp.concatenate([zrow, xb, zrow], axis=0)               # (H+2*pad, W*C_in)
        else:
            xp = xb
        # TODO(synk): for stride > 1, hoist the strided row gather out of the tap loop.
        taps = [xp[i:i + span:stride, :] for i in range(kh)]             # kh x (h_out, W*C_in)
        lhs_parts.append(jnp.concatenate(taps, axis=-1) if kh > 1 else taps[0])
        if skip:
            ident_parts.append(xb)

    lhs = jnp.concatenate(lhs_parts, axis=0) if b_blk > 1 else lhs_parts[0]
    k = lhs.shape[-1]
    if k_pad > k:                                                        # pad K to multiple of 128
        lhs = jnp.concatenate(
            [lhs, jnp.zeros((lhs.shape[0], k_pad - k), lhs.dtype)], axis=-1)

    # Conv as one MXU matmul (f32 accumulation); BN scale/bias + ReLU in f32 on the VPU.
    y = jnp.dot(lhs, w_ref[...], preferred_element_type=jnp.float32)     # (M, w_out*C_out)
    y = y * s_ref[...] + b_ref[...]
    y = jnp.maximum(y, 0.0)

    # Dropout: inference mode -> identity.
    # TODO(synk): torch.nn.Dropout training-mode RNG masking is not implemented.

    if skip:
        ident = jnp.concatenate(ident_parts, axis=0) if b_blk > 1 else ident_parts[0]
        if skip_map:
            # Channel repeat / truncation via a 0/1 block-diagonal map on the resident slab.
            y = y + jnp.dot(ident, r_ref[...], preferred_element_type=jnp.float32)
        else:
            y = y + ident.astype(jnp.float32)

    out_ref[...] = y.reshape(b_blk, h_out, n_cols).astype(out_ref.dtype)


def conv_block_nhwc(x_nhwc, params, *, padding, stride, skip, dropout=0.0, eps=1e-5):
    """NHWC-native ConvBlock forward (inference). Returns NHWC bf16."""
    del dropout  # nn.Dropout is the identity in eval mode.

    w = params["conv_w"]          # (C_out, C_in, kh, kw)
    cb = params["conv_b"]         # (C_out,)
    gamma, beta = params["bn_gamma"], params["bn_beta"]
    r_mean, r_var = params["bn_mean"], params["bn_var"]

    C_out, C_in, kh, kw = w.shape
    N, H, W, Cx = x_nhwc.shape
    assert Cx == C_in
    h_out = (H + 2 * padding - kh) // stride + 1
    w_out = (W + 2 * padding - kw) // stride + 1
    n_cols = w_out * C_out

    # ---- host-side weight prep (tiny, one-time per layer) ----
    # Block-Toeplitz conv weight over the UNPADDED row layout (horizontal halo folded in).
    w_hwio = jnp.transpose(w, (2, 3, 1, 0))                       # (kh, kw, C_in, C_out)
    P = np.zeros((kw, w_out, W), np.float32)
    for j in range(kw):
        for q in range(w_out):
            p = q * stride + j - padding
            if 0 <= p < W:
                P[j, q, p] = 1.0
    T = jnp.einsum('jqp,ijdo->ipdqo', jnp.asarray(P), w_hwio)     # (kh, W, C_in, w_out, C_out)
    K = kh * W * C_in
    K_pad = ((K + 127) // 128) * 128
    T = T.reshape(K, n_cols)
    if K_pad > K:
        T = jnp.concatenate([T, jnp.zeros((K_pad - K, n_cols), T.dtype)], axis=0)
    T = T.astype(jnp.bfloat16)

    # BatchNorm(eval): conv bias + BN shift folded into one f32 bias; scale applied in f32.
    scale = gamma * jax.lax.rsqrt(r_var + eps)
    bias = (cb - r_mean) * scale + beta
    scale_row = jnp.tile(scale, w_out).reshape(1, n_cols).astype(jnp.float32)
    bias_row = jnp.tile(bias, w_out).reshape(1, n_cols).astype(jnp.float32)

    # Input stream: one bf16 pass (free if the producer already hands over NHWC bf16).
    x3 = x_nhwc.astype(jnp.bfloat16).reshape(N, H, W * C_in)

    b_blk = _pick_batch_block(N, h_out)
    grid = (N // b_blk,)

    inputs = [x3, T, scale_row, bias_row]
    in_specs = [
        pl.BlockSpec((b_blk, H, W * C_in), lambda n: (n, 0, 0)),          # images (streamed)
        pl.BlockSpec((K_pad, n_cols), lambda n: (0, 0)),                  # Toeplitz weight (resident)
        pl.BlockSpec((1, n_cols), lambda n: (0, 0)),                      # f32 BN scale
        pl.BlockSpec((1, n_cols), lambda n: (0, 0)),                      # f32 folded bias
    ]

    skip_map = False
    if skip:
        assert h_out == H and w_out == W, "skip=True requires conv output spatial == input spatial"
        if C_in != C_out:
            skip_map = True
            if C_in < C_out:
                assert C_out % C_in == 0
                rep = C_out // C_in
                Rm = np.zeros((C_in, C_out), np.float32)
                Rm[np.arange(C_out) // rep, np.arange(C_out)] = 1.0       # einops '(c repeat)' order
            else:
                Rm = np.eye(C_in, C_out, dtype=np.float32)                # channel truncation
            R_big = jnp.asarray(np.kron(np.eye(W, dtype=np.float32), Rm), jnp.bfloat16)
            inputs.append(R_big)
            in_specs.append(pl.BlockSpec((W * C_in, W * C_out), lambda n: (0, 0)))

    kernel = functools.partial(
        _convblock_kernel, b_blk=b_blk, kh=kh, stride=stride, pad=padding,
        h_out=h_out, w_out=w_out, c_out=C_out, k_pad=K_pad,
        skip=skip, skip_map=skip_map)

    flops = 2 * N * h_out * w_out * C_out * kh * kw * C_in
    bytes_accessed = (x3.size * 2 + T.size * 2 + scale_row.size * 4 + bias_row.size * 4
                      + N * h_out * n_cols * 2)
    if skip_map:
        flops += 2 * N * h_out * (W * C_in) * (W * C_out)
        bytes_accessed += (W * C_in) * (W * C_out) * 2

    out3 = pl.pallas_call(
        kernel,
        out_shape=jax.ShapeDtypeStruct((N, h_out, n_cols), jnp.bfloat16),
        grid_spec=pltpu.PrefetchScalarGridSpec(
            num_scalar_prefetch=0,
            grid=grid,
            in_specs=in_specs,
            out_specs=pl.BlockSpec((b_blk, h_out, n_cols), lambda n: (n, 0, 0)),
        ),
        compiler_params=pltpu.CompilerParams(
            dimension_semantics=("parallel",),
            vmem_limit_bytes=32 * 1024 * 1024,   # explicit (> v5e 16 MiB default, < v7x cap)
        ),
        cost_estimate=pl.CostEstimate(flops=int(flops), transcendentals=0,
                                      bytes_accessed=int(bytes_accessed)),
    )(*inputs)

    return out3.reshape(N, h_out, w_out, C_out)        # NHWC bf16 (metadata-only reshape)


def conv_block_forward(x_nchw, params, *, kernel_size, padding, stride, skip,
                       dropout=0.0, eps=1e-5):
    """Module-parity interface: NCHW f32 in / NCHW f32 out.  In a real NHWC network call
    conv_block_nhwc directly and avoid both layout transposes (perf review)."""
    del kernel_size
    x_nhwc = jnp.transpose(x_nchw, (0, 2, 3, 1))
    out_nhwc = conv_block_nhwc(x_nhwc, params, padding=padding, stride=stride,
                               skip=skip, dropout=dropout, eps=eps)
    return jnp.transpose(out_nhwc, (0, 3, 1, 2)).astype(jnp.float32)


def _reference(x, params, *, padding, stride, skip, eps=1e-5):
    w, cb = params["conv_w"], params["conv_b"]
    y = jax.lax.conv_general_dilated(
        x, w, window_strides=(stride, stride),
        padding=[(padding, padding), (padding, padding)],
        dimension_numbers=("NCHW", "OIHW", "NCHW"),
        precision=jax.lax.Precision.HIGHEST,
    ) + cb[None, :, None, None]
    y = (y - params["bn_mean"][None, :, None, None]) / jnp.sqrt(
        params["bn_var"][None, :, None, None] + eps
    ) * params["bn_gamma"][None, :, None, None] + params["bn_beta"][None, :, None, None]
    y = jnp.maximum(y, 0.0)
    if skip:
        ident = x
        c_in, c_out = x.shape[1], y.shape[1]
        if c_in != c_out:
            if c_in < c_out:
                ident = jnp.repeat(ident, c_out // c_in, axis=1)
            else:
                ident = ident[:, :c_out]
        y = y + ident
    return y


if __name__ == "__main__":
    # Small shapes consistent with the module's forward.
    N, C_in, H, W = 2, 4, 16, 16
    C_out, ksize, padding, stride = 8, 3, 1, 1
    skip = True

    key = jax.random.PRNGKey(0)
    k1, k2, k3, k4, k5, k6, k7 = jax.random.split(key, 7)

    x = jax.random.normal(k1, (N, C_in, H, W), jnp.float32)
    params = {
        "conv_w": 0.1 * jax.random.normal(k2, (C_out, C_in, ksize, ksize), jnp.float32),
        "conv_b": 0.1 * jax.random.normal(k3, (C_out,), jnp.float32),
        "bn_gamma": 1.0 + 0.1 * jax.random.normal(k4, (C_out,), jnp.float32),
        "bn_beta": 0.1 * jax.random.normal(k5, (C_out,), jnp.float32),
        "bn_mean": 0.1 * jax.random.normal(k6, (C_out,), jnp.float32),
        "bn_var": 1.0 + 0.1 * jax.random.uniform(k7, (C_out,), jnp.float32),
    }

    ref_nchw = _reference(x, params, padding=padding, stride=stride, skip=skip)
    ref_nhwc = jnp.transpose(ref_nchw, (0, 2, 3, 1))

    # Optimized path: the producer layer hands over NHWC bf16; output stays NHWC bf16.
    x_nhwc_bf16 = jnp.transpose(x, (0, 2, 3, 1)).astype(jnp.bfloat16)
    out_nhwc = conv_block_nhwc(x_nhwc_bf16, params, padding=padding, stride=stride, skip=skip)
    out_nhwc = jax.block_until_ready(out_nhwc)
    assert out_nhwc.shape == (N, H, W, C_out)
    err = float(jnp.max(jnp.abs(out_nhwc.astype(jnp.float32) - ref_nhwc)))
    assert jnp.allclose(out_nhwc.astype(jnp.float32), ref_nhwc, atol=7e-2, rtol=5e-2), err

    # Module-parity NCHW interface (adds the two layout passes that the core path avoids).
    out_nchw = jax.block_until_ready(
        conv_block_forward(x, params, kernel_size=ksize, padding=padding,
                           stride=stride, skip=skip))
    assert out_nchw.shape == ref_nchw.shape == (N, C_out, H, W)
    err2 = float(jnp.max(jnp.abs(out_nchw - ref_nchw)))
    assert jnp.allclose(out_nchw, ref_nchw, atol=7e-2, rtol=5e-2), err2

    print("KERNEL_OK")
</pallas_src>

<mosaic_0001>
module attributes {stable_mosaic.version = 11 : i64} {
  func.func @_convblock_kernel(%arg0: i32, %arg1: memref<1x16x64xbf16, #tpu.memory_space<vmem>>, %arg2: memref<256x128xbf16, #tpu.memory_space<vmem>>, %arg3: memref<1x128xf32, #tpu.memory_space<vmem>>, %arg4: memref<1x128xf32, #tpu.memory_space<vmem>>, %arg5: memref<64x128xbf16, #tpu.memory_space<vmem>>, %arg6: memref<1x16x128xbf16, #tpu.memory_space<vmem>>) attributes {dimension_semantics = [#tpu.dimension_semantics<parallel>], iteration_bounds = array<i64: 2>, scalar_prefetch = 0 : i64, scratch_operands = 0 : i64, tpu.core_type = #tpu.core_type<tc>, window_params = [{transform_indices = @transform_0, window_bounds = array<i64: 1, 16, 64>}, {pipeline_mode = #tpu.pipeline_mode<synchronous>, transform_indices = @transform_1, window_bounds = array<i64: 256, 128>}, {pipeline_mode = #tpu.pipeline_mode<synchronous>, transform_indices = @transform_2, window_bounds = array<i64: 1, 128>}, {pipeline_mode = #tpu.pipeline_mode<synchronous>, transform_indices = @transform_3, window_bounds = array<i64: 1, 128>}, {pipeline_mode = #tpu.pipeline_mode<synchronous>, transform_indices = @transform_4, window_bounds = array<i64: 64, 128>}, {transform_indices = @transform_5, window_bounds = array<i64: 1, 16, 128>}]} {
    %c0 = arith.constant 0 : index
    %c0_0 = arith.constant 0 : index
    %c0_1 = arith.constant 0 : index
    %0 = vector.load %arg1[%c0, %c0_0, %c0_1] : memref<1x16x64xbf16, #tpu.memory_space<vmem>>, vector<1x16x64xbf16>
    %1 = vector.shape_cast %0 : vector<1x16x64xbf16> to vector<16x64xbf16>
    %cst = arith.constant 0.000000e+00 : bf16
    %2 = vector.broadcast %cst : bf16 to vector<1x64xbf16>
    %3 = tpu.concatenate %2, %1, %2 in 0 : vector<1x64xbf16>, vector<16x64xbf16>, vector<1x64xbf16> -> vector<18x64xbf16>
    %4 = vector.extract_strided_slice %3 {offsets = [0, 0], sizes = [16, 64], strides = [1, 1]} : vector<18x64xbf16> to vector<16x64xbf16>
    %5 = vector.extract_strided_slice %3 {offsets = [1, 0], sizes = [16, 64], strides = [1, 1]} : vector<18x64xbf16> to vector<16x64xbf16>
    %6 = vector.extract_strided_slice %3 {offsets = [2, 0], sizes = [16, 64], strides = [1, 1]} : vector<18x64xbf16> to vector<16x64xbf16>
    %7 = tpu.concatenate %4, %5, %6 in 1 : vector<16x64xbf16>, vector<16x64xbf16>, vector<16x64xbf16> -> vector<16x192xbf16>
    %cst_2 = arith.constant 0.000000e+00 : bf16
    %8 = vector.broadcast %cst_2 : bf16 to vector<16x64xbf16>
    %9 = tpu.concatenate %7, %8 in 1 : vector<16x192xbf16>, vector<16x64xbf16> -> vector<16x256xbf16>
    %c0_3 = arith.constant 0 : index
    %c0_4 = arith.constant 0 : index
    %10 = vector.load %arg2[%c0_3, %c0_4] : memref<256x128xbf16, #tpu.memory_space<vmem>>, vector<256x128xbf16>
    %cst_5 = arith.constant dense<0.000000e+00> : vector<16x128xf32>
    %11 = tpu.matmul %9, %10, %cst_5 {dimension_numbers = #tpu.dot_dimension_numbers<[1], [0], [0], [1], [0, 0, 1, 1], [], []>} : vector<16x256xbf16>, vector<256x128xbf16>, vector<16x128xf32> -> vector<16x128xf32>
    %c0_6 = arith.constant 0 : index
    %c0_7 = arith.constant 0 : index
    %12 = vector.load %arg3[%c0_6, %c0_7] : memref<1x128xf32, #tpu.memory_space<vmem>>, vector<1x128xf32>
    %13 = vector.broadcast %12 : vector<1x128xf32> to vector<16x128xf32>
    %14 = arith.mulf %11, %13 : vector<16x128xf32>
    %c0_8 = arith.constant 0 : index
    %c0_9 = arith.constant 0 : index
    %15 = vector.load %arg4[%c0_8, %c0_9] : memref<1x128xf32, #tpu.memory_space<vmem>>, vector<1x128xf32>
    %16 = vector.broadcast %15 : vector<1x128xf32> to vector<16x128xf32>
    %17 = arith.addf %14, %16 : vector<16x128xf32>
    %cst_10 = arith.constant 0.000000e+00 : f32
    %18 = vector.broadcast %cst_10 : f32 to vector<16x128xf32>
    %19 = arith.maximumf %17, %18 : vector<16x128xf32>
    %c0_11 = arith.constant 0 : index
    %c0_12 = arith.constant 0 : index
    %20 = vector.load %arg5[%c0_11, %c0_12] : memref<64x128xbf16, #tpu.memory_space<vmem>>, vector<64x128xbf16>
    %cst_13 = arith.constant dense<0.000000e+00> : vector<16x128xf32>
    %21 = tpu.matmul %1, %20, %cst_13 {dimension_numbers = #tpu.dot_dimension_numbers<[1], [0], [0], [1], [0, 0, 1, 1], [], []>} : vector<16x64xbf16>, vector<64x128xbf16>, vector<16x128xf32> -> vector<16x128xf32>
    %22 = arith.addf %19, %21 : vector<16x128xf32>
    %23 = vector.shape_cast %22 : vector<16x128xf32> to vector<1x16x128xf32>
    %24 = arith.truncf %23 : vector<1x16x128xf32> to vector<1x16x128xbf16>
    %c0_14 = arith.constant 0 : index
    %c0_15 = arith.constant 0 : index
    %c0_16 = arith.constant 0 : index
    %25 = vector.load %arg6[%c0_14, %c0_15, %c0_16] : memref<1x16x128xbf16, #tpu.memory_space<vmem>>, vector<1x16x128xbf16>
    tpu.vector_store %arg6[%c0_14, %c0_15, %c0_16], %24 {strides = array<i32>} : memref<1x16x128xbf16, #tpu.memory_space<vmem>>, vector<1x16x128xbf16>,
    return
  }
  func.func @transform_0(%arg0: i32) -> (i32, i32, i32) {
    %c0_i32 = arith.constant 0 : i32
    %c0_i32_0 = arith.constant 0 : i32
    %c0_i32_1 = arith.constant 0 : i32
    return %arg0, %c0_i32, %c0_i32_0 : i32, i32, i32
  }
  func.func @transform_1(%arg0: i32) -> (i32, i32) {
    %c0_i32 = arith.constant 0 : i32
    %c0_i32_0 = arith.constant 0 : i32
    %c0_i32_1 = arith.constant 0 : i32
    return %c0_i32, %c0_i32_0 : i32, i32
  }
  func.func @transform_2(%arg0: i32) -> (i32, i32) {
    %c0_i32 = arith.constant 0 : i32
    %c0_i32_0 = arith.constant 0 : i32
    %c0_i32_1 = arith.constant 0 : i32
    return %c0_i32, %c0_i32_0 : i32, i32
  }
  func.func @transform_3(%arg0: i32) -> (i32, i32) {
    %c0_i32 = arith.constant 0 : i32
    %c0_i32_0 = arith.constant 0 : i32
    %c0_i32_1 = arith.constant 0 : i32
    return %c0_i32, %c0_i32_0 : i32, i32
  }
  func.func @transform_4(%arg0: i32) -> (i32, i32) {
    %c0_i32 = arith.constant 0 : i32
    %c0_i32_0 = arith.constant 0 : i32
    %c0_i32_1 = arith.constant 0 : i32
    return %c0_i32, %c0_i32_0 : i32, i32
  }
  func.func @transform_5(%arg0: i32) -> (i32, i32, i32) {
    %c0_i32 = arith.constant 0 : i32
    %c0_i32_0 = arith.constant 0 : i32
    %c0_i32_1 = arith.constant 0 : i32
    return %arg0, %c0_i32, %c0_i32_0 : i32, i32, i32
  }
}

</mosaic_0001>

<llo_original>
// kernel: tpu_custom_call.1
$region0: #{tpu_custom_call.1}
  #allocation0 [shape = 'u32[]', space=smem, size = 0x4, offset = 0x4, fixed_abs, tag = 'smem constant byte address 0x4 - core index']
  #allocation1 [shape = 'u32[144,128]{1,0:T(1,128)}', space=vmem, size = 0x12000, scoped, tag = 'internal scratch']
  %s0 = inlined_call_operand.hbm [shape: bf16[2,16,64], index: 0, kind: input, shape index: {}]
  %s1 = inlined_call_operand.hbm [shape: bf16[256,128], index: 1, kind: input, shape index: {}]
  %s2 = inlined_call_operand.vmem [shape: f32[1,128], index: 2, kind: input, shape index: {}]
  %s3 = inlined_call_operand.vmem [shape: f32[1,128], index: 3, kind: input, shape index: {}]
  %s4 = inlined_call_operand.hbm [shape: bf16[64,128], index: 4, kind: input, shape index: {}]
  %s5 = inlined_call_operand.hbm [shape: bf16[2,16,128], index: 5, kind: output, shape index: {}]
  %s6 = sld [smem:[#allocation0]]
  $region65: #{tpu_custom_call.1} parent=0
    _
  %s8 = ssub.s32 1, %s6
  %s9 = scalar_select 0, %s8, %s6
  $region1: #{tpu_custom_call.1} parent=0
    #allocation2 [shape = 'u8[8192]{0}', space=vmem, size = 0x2000, scoped, tag = 'input window, operand 0']
    #allocation3 [shape = 's32[2]{0}', space=sflag, size = 0x8, scoped, tag = 'scoped memory for tpu_custom_call.1']
    #allocation4 [shape = 's32[2]{0}', space=sflag, size = 0x8, scoped, tag = 'scoped memory for tpu_custom_call.1']
    #allocation5 [shape = 'u8[65536]{0}', space=vmem, size = 0x10000, scoped, tag = 'input window, operand 1, single buffered']
    #allocation6 [shape = 's32[1]{0}', space=sflag, size = 0x4, scoped, tag = 'scoped memory for tpu_custom_call.1']
    #allocation7 [shape = 'u8[16384]{0}', space=vmem, size = 0x4000, scoped, tag = 'input window, operand 4, single buffered']
    #allocation8 [shape = 'u8[8192]{0}', space=vmem, size = 0x2000, scoped, tag = 'output window, operand 0']
    %10 = vsyncpa [#allocation3], 0
    %s11 = scalar_lea.sflag [#allocation3], 1
    %12 = vsyncpa %s11, 0
    %13 = vsyncpa [#allocation6], 0
    %14 = vsyncpa [#allocation4], 0
    %s15 = scalar_lea.sflag [#allocation4], 1
    %16 = vsyncpa %s15, 0
    loop: start=0, step=1, limit=4
    $region2: #{tpu_custom_call.1} parent=1 // loop_pre_header
      _
    $region3: #{tpu_custom_call.1} parent=1 // loop_header
      %s18 = sphi 0, %s22
      %p19 = scmp.ge.s32.totalorder %s18, 4
      %s28 = sphi 0, %s30
      %s31 = sphi 0, %s28
      %s32 = sphi 0, %s31
      %s48 = sphi 0, %s32
      %s52 = sphi 0, %s52
      %s54 = sphi 0, %s52
      %s55 = sphi 0, %s54
      %s69 = sphi 0, %s55
      %s73 = sphi 0, %s73
      %s75 = sphi 0, %s73
      %s76 = sphi 0, %s75
      %s90 = sphi 0, %s76
      %s94 = sphi 0, %s94
      %s96 = sphi 0, %s94
      %s97 = sphi 0, %s96
      %s111 = sphi 0, %s97
      %s115 = sphi 0, %s115
      %s117 = sphi 0, %s115
      %s118 = sphi 0, %s117
      %s132 = sphi 0, %s118
      %s138 = sphi 0, %s140
      %s141 = sphi 0, %s138
      %s142 = sphi 0, %s141
      %s158 = sphi 0, %s142
    $region4: #{tpu_custom_call.1} parent=1 // loop_header_branch
      %21 = sbr.rel (%p19) target = $region8
    $region5: #{tpu_custom_call.1} parent=1 // loop_body
      %s23 = ssub.s32 %s18, 1
      %s24 = ssub.s32 %s18, 2
      %s25 = sadd.s32 %s18, 1
      %s26 = ssub.s32 %s18, %s25
      %p27 = scmp.eq.s32.totalorder %s26, 0
      %s29 = sadd.s32 %s28, 1
      %s30 = scalar_select %p27, %s28, %s29
      %p33 = pneg %p27
      %p34 = scmp.eq.s32.totalorder %s18, 1
      %p35 = por %p33, %p34
      %p36 = scmp.ne.s32.totalorder %s28, %s31
      %p37 = scmp.eq.s32.totalorder %s18, 0
      %p38 = por %p36, %p37
      %p39 = scmp.ne.s32.totalorder %s28, %s31
      %p40 = scmp.eq.s32.totalorder %s23, 1
      %p41 = por %p39, %p40
      %p42 = scmp.ne.s32.totalorder %s31, %s32
      %p43 = scmp.eq.s32.totalorder %s23, 0
      %p44 = por %p42, %p43
      %p45 = scmp.ne.s32.totalorder %s31, %s32
      %p46 = scmp.eq.s32.totalorder %s24, 1
      %p47 = por %p45, %p46
      %p49 = scmp.ne.s32.totalorder %s32, %s48
      %p50 = scmp.eq.s32.totalorder %s24, 0
      %p51 = por %p49, %p50
      %s53 = sadd.s32 %s52, 1
      %p56 = scmp.eq.s32.totalorder %s18, 1
      %p57 = scmp.ne.s32.totalorder %s52, %s54
      %p58 = scmp.eq.s32.totalorder %s18, 0
      %p59 = por %p57, %p58
      %p60 = scmp.ne.s32.totalorder %s52, %s54
      %p61 = scmp.eq.s32.totalorder %s23, 1
      %p62 = por %p60, %p61
      %p63 = scmp.ne.s32.totalorder %s54, %s55
      %p64 = scmp.eq.s32.totalorder %s23, 0
      %p65 = por %p63, %p64
      %p66 = scmp.ne.s32.totalorder %s54, %s55
      %p67 = scmp.eq.s32.totalorder %s24, 1
      %p68 = por %p66, %p67
      %p70 = scmp.ne.s32.totalorder %s55, %s69
      %p71 = scmp.eq.s32.totalorder %s24, 0
      %p72 = por %p70, %p71
      %s74 = sadd.s32 %s73, 1
      %p77 = scmp.eq.s32.totalorder %s18, 1
      %p78 = scmp.ne.s32.totalorder %s73, %s75
      %p79 = scmp.eq.s32.totalorder %s18, 0
      %p80 = por %p78, %p79
      %p81 = scmp.ne.s32.totalorder %s73, %s75
      %p82 = scmp.eq.s32.totalorder %s23, 1
      %p83 = por %p81, %p82
      %p84 = scmp.ne.s32.totalorder %s75, %s76
      %p85 = scmp.eq.s32.totalorder %s23, 0
      %p86 = por %p84, %p85
      %p87 = scmp.ne.s32.totalorder %s75, %s76
      %p88 = scmp.eq.s32.totalorder %s24, 1
      %p89 = por %p87, %p88
      %p91 = scmp.ne.s32.totalorder %s76, %s90
      %p92 = scmp.eq.s32.totalorder %s24, 0
      %p93 = por %p91, %p92
      %s95 = sadd.s32 %s94, 1
      %p98 = scmp.eq.s32.totalorder %s18, 1
      %p99 = scmp.ne.s32.totalorder %s94, %s96
      %p100 = scmp.eq.s32.totalorder %s18, 0
      %p101 = por %p99, %p100
      %p102 = scmp.ne.s32.totalorder %s94, %s96
      %p103 = scmp.eq.s32.totalorder %s23, 1
      %p104 = por %p102, %p103
      %p105 = scmp.ne.s32.totalorder %s96, %s97
      %p106 = scmp.eq.s32.totalorder %s23, 0
      %p107 = por %p105, %p106
      %p108 = scmp.ne.s32.totalorder %s96, %s97
      %p109 = scmp.eq.s32.totalorder %s24, 1
      %p110 = por %p108, %p109
      %p112 = scmp.ne.s32.totalorder %s97, %s111
      %p113 = scmp.eq.s32.totalorder %s24, 0
      %p114 = por %p112, %p113
      %s116 = sadd.s32 %s115, 1
      %p119 = scmp.eq.s32.totalorder %s18, 1
      %p120 = scmp.ne.s32.totalorder %s115, %s117
      %p121 = scmp.eq.s32.totalorder %s18, 0
      %p122 = por %p120, %p121
      %p123 = scmp.ne.s32.totalorder %s115, %s117
      %p124 = scmp.eq.s32.totalorder %s23, 1
      %p125 = por %p123, %p124
      %p126 = scmp.ne.s32.totalorder %s117, %s118
      %p127 = scmp.eq.s32.totalorder %s23, 0
      %p128 = por %p126, %p127
      %p129 = scmp.ne.s32.totalorder %s117, %s118
      %p130 = scmp.eq.s32.totalorder %s24, 1
      %p131 = por %p129, %p130
      %p133 = scmp.ne.s32.totalorder %s118, %s132
      %p134 = scmp.eq.s32.totalorder %s24, 0
      %p135 = por %p133, %p134
      %s136 = ssub.s32 %s18, %s25
      %p137 = scmp.eq.s32.totalorder %s136, 0
      %s139 = sadd.s32 %s138, 1
      %s140 = scalar_select %p137, %s138, %s139
      %p143 = pneg %p137
      %p144 = scmp.eq.s32.totalorder %s18, 1
      %p145 = por %p143, %p144
      %p146 = scmp.ne.s32.totalorder %s138, %s141
      %p147 = scmp.eq.s32.totalorder %s18, 0
      %p148 = por %p146, %p147
      %p149 = scmp.ne.s32.totalorder %s138, %s141
      %p150 = scmp.eq.s32.totalorder %s23, 1
      %p151 = por %p149, %p150
      %p152 = scmp.ne.s32.totalorder %s141, %s142
      %p153 = scmp.eq.s32.totalorder %s23, 0
      %p154 = por %p152, %p153
      %p155 = scmp.ne.s32.totalorder %s141, %s142
      %p156 = scmp.eq.s32.totalorder %s24, 1
      %p157 = por %p155, %p156
      %p159 = scmp.ne.s32.totalorder %s142, %s158
      %p160 = scmp.eq.s32.totalorder %s24, 0
      %p161 = por %p159, %p160
      %p162 = scmp.le.s32.totalorder 1, %s18
      %p163 = scmp.lt.s32.totalorder %s18, 3
      %p164 = pnand %p162, %p163
      %p165 = pneg %p164
      // Predicated region
      $region9: #{tpu_custom_call.1} parent=5 // pred_check
        _
      $region10: #{tpu_custom_call.1} parent=5 // pred_check_branch
        %167 = sbr.rel (%p164) target = $region12
      $region11: #{tpu_custom_call.1} parent=5 // pred_region
        %s168 = ssub.s32 %s18, 1
        // Predicated region
        $region13: #{tpu_custom_call.1} parent=11 // pred_check
          %p169 = pneg %p65
        $region14: #{tpu_custom_call.1} parent=11 // pred_check_branch
          %171 = sbr.rel (%p169) target = $region16
        $region15: #{tpu_custom_call.1} parent=11 // pred_region
          %s173 = ssub.s32 2048, 2048
          %174 = vsyncadd [#allocation6], %s173
          %s175 = sshll.u32 [#allocation5], 4
          %s176 = int_to_ptr.vmem [resolvable:$true] %s175
          %181 = dma.hbm_to_vmem [thread:$0]  %s1, 2048, %s176, [#allocation6], 64, 64, 4
        $region16: #{tpu_custom_call.1} parent=11 // pred_fallthru
          _
        // Predicated region
        $region17: #{tpu_custom_call.1} parent=11 // pred_check
          %p182 = pneg %p86
        $region18: #{tpu_custom_call.1} parent=11 // pred_check_branch
          %184 = sbr.rel (%p182) target = $region20
        $region19: #{tpu_custom_call.1} parent=11 // pred_region
          _
        $region20: #{tpu_custom_call.1} parent=11 // pred_fallthru
          _
        // Predicated region
        $region21: #{tpu_custom_call.1} parent=11 // pred_check
          %p185 = pneg %p107
        $region22: #{tpu_custom_call.1} parent=11 // pred_check_branch
          %187 = sbr.rel (%p185) target = $region24
        $region23: #{tpu_custom_call.1} parent=11 // pred_region
          _
        $region24: #{tpu_custom_call.1} parent=11 // pred_fallthru
          _
        // Predicated region
        $region25: #{tpu_custom_call.1} parent=11 // pred_check
          %p188 = pneg %p128
        $region26: #{tpu_custom_call.1} parent=11 // pred_check_branch
          %190 = sbr.rel (%p188) target = $region28
        $region27: #{tpu_custom_call.1} parent=11 // pred_region
          %s192 = ssub.s32 512, 512
          %193 = vsyncadd [#allocation6], %s192
          %s194 = sshll.u32 [#allocation7], 4
          %s195 = int_to_ptr.vmem [resolvable:$true] %s194
          %200 = dma.hbm_to_vmem [thread:$0]  %s4, 512, %s195, [#allocation6], 64, 64, 4
        $region28: #{tpu_custom_call.1} parent=11 // pred_fallthru
          _
      $region12: #{tpu_custom_call.1} parent=5 // pred_fallthru
        _
      %p201 = scmp.lt.s32.totalorder %s18, 2
      // Predicated region
      $region29: #{tpu_custom_call.1} parent=5 // pred_check
        %p202 = pneg %p201
      $region30: #{tpu_custom_call.1} parent=5 // pred_check_branch
        %204 = sbr.rel (%p202) target = $region32
      $region31: #{tpu_custom_call.1} parent=5 // pred_region
        // Predicated region
        $region33: #{tpu_custom_call.1} parent=31 // pred_check
          %p205 = pneg %p38
        $region34: #{tpu_custom_call.1} parent=31 // pred_check_branch
          %207 = sbr.rel (%p205) target = $region36
        $region35: #{tpu_custom_call.1} parent=31 // pred_region
          %s208 = sand.u32 %s28, 1
          %s209 = scalar_lea.sflag [#allocation3], %s208
          %s210 = sand.u32 %s28, 1
          %s211 = smul.addr %s210, 8
          %s212 = scalar_lea.vmem [#allocation2], %s211
          %s214 = ssub.s32 128, 128
          %215 = vsyncadd %s209, %s214
          %s216 = smul.addr %s18, 2
          %s217 = smul.addr %s216, 64
          %s218 = scalar_lea.hbm %s0, %s217
          %s219 = sshll.u32 %s212, 4
          %s220 = int_to_ptr.vmem [resolvable:$true] %s219
          %225 = dma.hbm_to_vmem [thread:$0]  %s218, 128, %s220, %s209, 64, 64, 4
        $region36: #{tpu_custom_call.1} parent=31 // pred_fallthru
          _
      $region32: #{tpu_custom_call.1} parent=5 // pred_fallthru
        _
      %p226 = scmp.le.s32.totalorder 1, %s18
      %p227 = scmp.lt.s32.totalorder %s18, 3
      %p228 = pnand %p226, %p227
      %p229 = pneg %p228
      // Predicated region
      $region37: #{tpu_custom_call.1} parent=5 // pred_check
        _
      $region38: #{tpu_custom_call.1} parent=5 // pred_check_branch
        %231 = sbr.rel (%p228) target = $region40
      $region39: #{tpu_custom_call.1} parent=5 // pred_region
        %s232 = ssub.s32 %s18, 1
        %s233 = sand.u32 %s31, 1
        %s234 = scalar_lea.sflag [#allocation3], %s233
        %s235 = sand.u32 %s31, 1
        %s236 = smul.addr %s235, 8
        %s237 = scalar_lea.vmem [#allocation2], %s236
        // Predicated region
        $region41: #{tpu_custom_call.1} parent=39 // pred_check
          %p238 = pneg %p44
        $region42: #{tpu_custom_call.1} parent=39 // pred_check_branch
          %240 = sbr.rel (%p238) target = $region44
        $region43: #{tpu_custom_call.1} parent=39 // pred_region
          %241 = dma.done %s234, 128
        $region44: #{tpu_custom_call.1} parent=39 // pred_fallthru
          _
        // Predicated region
        $region45: #{tpu_custom_call.1} parent=39 // pred_check
          %p242 = pneg %p65
        $region46: #{tpu_custom_call.1} parent=39 // pred_check_branch
          %244 = sbr.rel (%p242) target = $region48
        $region47: #{tpu_custom_call.1} parent=39 // pred_region
          %245 = dma.done [#allocation6], 2048
        $region48: #{tpu_custom_call.1} parent=39 // pred_fallthru
          _
        // Predicated region
        $region49: #{tpu_custom_call.1} parent=39 // pred_check
          %p246 = pneg %p128
        $region50: #{tpu_custom_call.1} parent=39 // pred_check_branch
          %248 = sbr.rel (%p246) target = $region52
        $region51: #{tpu_custom_call.1} parent=39 // pred_region
          %249 = dma.done [#allocation6], 512
        $region52: #{tpu_custom_call.1} parent=39 // pred_fallthru
          _
        %s250 = sand.u32 %s31, 1
        %s251 = scalar_lea.sflag [#allocation3], %s250
        %s252 = sand.u32 %s31, 1
        %s253 = smul.addr %s252, 8
        %s254 = scalar_lea.vmem [#allocation2], %s253
        %p255 = pneg %p44
        %p256 = pneg %p41
        %p257 = pneg %p65
        %p258 = pneg %p62
        %p259 = pneg %p86
        %p260 = pneg %p83
        %p261 = pneg %p107
        %p262 = pneg %p104
        %p263 = pneg %p128
        %p264 = pneg %p125
        %p265 = pneg %p154
        %p266 = pneg %p151
        %s267 = sand.u32 %s141, 1
        %s268 = scalar_lea.sflag [#allocation4], %s267
        %s269 = sand.u32 %s141, 1
        %s270 = smul.addr %s269, 8
        %s271 = scalar_lea.vmem [#allocation8], %s270
        %v273 = vld [vmem:[%s237] sm:$0xf]
        %v274 = vld [vmem:[%s237 + $0x4] sm:$0xf]
        %v277 = vunpack.c.l.b16 %v273
        %v278 = vunpack.c.l.b16 %v274
        %v279 = vpack.c.b16 %v278, %v277
        %v281 = vshrl.u32 %v279, 16
        %v283 = vrot.slane %v281, 7
        %v284 = vshll.u32 %v279, 16
        %v286 = vor.u32 %v283, %v284
        %vm289 = vcmask 1040384
        %vm290 = vsmask.f32 256
        %vm291 = vmand %vm289, %vm290
        %v292 = vsel %vm291, 0, %v286
        %v293 = vsel %vm291, %v283, 0
        %vm294 = vsmask.f32 7424
        %v296 = vshrl.u32 %v292, 16
        %v298 = vshll.u32 %v292, 16
        %v300 = vrot.slane %v298, 1
        %v301 = vor.u32 %v296, %v300
        %v303 = vshll.u32 %v293, 16
        %v305 = vrot.slane %v303, 1
        %v306 = vsel %vm294, %v301, %v305
        %307 = vrot.lane.b32.xlu0 %v306, 64
        %v308 = vpop.permute.xlu0 %307
        %vm311 = vcmask 1046528
        %v312 = vrot.slane %v292, 1
        %v313 = vrot.slane %v293, 1
        %v314 = vsel %vm311, %v312, %v313
        %vm315 = vcmask 523264
        %v317 = vsel %vm315, %v292, %v308
        %v321 = vsel %vm315, %v314, 0
        %v323 = vld [vmem:[#allocation5] sm:$0xf]
        %v324 = vld [vmem:[#allocation5 + $0x4] sm:$0xf]
        %v325 = vld [vmem:[#allocation5 + $0x8] sm:$0xf]
        %v326 = vld [vmem:[#allocation5 + $0xc] sm:$0xf]
        %v327 = vld [vmem:[#allocation5 + $0x10] sm:$0xf]
        %v328 = vld [vmem:[#allocation5 + $0x14] sm:$0xf]
        %v329 = vld [vmem:[#allocation5 + $0x18] sm:$0xf]
        %v330 = vld [vmem:[#allocation5 + $0x1c] sm:$0xf]
        %v331 = vld [vmem:[#allocation5 + $0x20] sm:$0xf]
        %v332 = vld [vmem:[#allocation5 + $0x24] sm:$0xf]
        %v333 = vld [vmem:[#allocation5 + $0x28] sm:$0xf]
        %v334 = vld [vmem:[#allocation5 + $0x2c] sm:$0xf]
        %v335 = vld [vmem:[#allocation5 + $0x30] sm:$0xf]
        %v336 = vld [vmem:[#allocation5 + $0x34] sm:$0xf]
        %v337 = vld [vmem:[#allocation5 + $0x38] sm:$0xf]
        %v338 = vld [vmem:[#allocation5 + $0x3c] sm:$0xf]
        %v339 = vld [vmem:[#allocation5 + $0x40] sm:$0xf]
        %v340 = vld [vmem:[#allocation5 + $0x44] sm:$0xf]
        %v341 = vld [vmem:[#allocation5 + $0x48] sm:$0xf]
        %v342 = vld [vmem:[#allocation5 + $0x4c] sm:$0xf]
        %v343 = vld [vmem:[#allocation5 + $0x50] sm:$0xf]
        %v344 = vld [vmem:[#allocation5 + $0x54] sm:$0xf]
        %v345 = vld [vmem:[#allocation5 + $0x58] sm:$0xf]
        %v346 = vld [vmem:[#allocation5 + $0x5c] sm:$0xf]
        %v347 = vld [vmem:[#allocation5 + $0x60] sm:$0xf]
        %v348 = vld [vmem:[#allocation5 + $0x64] sm:$0xf]
        %v349 = vld [vmem:[#allocation5 + $0x68] sm:$0xf]
        %v350 = vld [vmem:[#allocation5 + $0x6c] sm:$0xf]
        %v351 = vld [vmem:[#allocation5 + $0x70] sm:$0xf]
        %v352 = vld [vmem:[#allocation5 + $0x74] sm:$0xf]
        %v353 = vld [vmem:[#allocation5 + $0x78] sm:$0xf]
        %v354 = vld [vmem:[#allocation5 + $0x7c] sm:$0xf]
        %v387 = vunpack.c.l.b16 %v323
        %v388 = vunpack.c.l.b16 %v324
        %v389 = vunpack.c.l.b16 %v325
        %v390 = vunpack.c.l.b16 %v326
        %v391 = vunpack.c.l.b16 %v327
        %v392 = vunpack.c.l.b16 %v328
        %v393 = vunpack.c.l.b16 %v329
        %v394 = vunpack.c.l.b16 %v330
        %v395 = vunpack.c.l.b16 %v331
        %v396 = vunpack.c.l.b16 %v332
        %v397 = vunpack.c.l.b16 %v333
        %v398 = vunpack.c.l.b16 %v334
        %v399 = vunpack.c.l.b16 %v335
        %v400 = vunpack.c.l.b16 %v336
        %v401 = vunpack.c.l.b16 %v337
        %v402 = vunpack.c.l.b16 %v338
        %v403 = vunpack.c.l.b16 %v339
        %v404 = vunpack.c.l.b16 %v340
        %v405 = vunpack.c.l.b16 %v341
        %v406 = vunpack.c.l.b16 %v342
        %v407 = vunpack.c.l.b16 %v343
        %v408 = vunpack.c.l.b16 %v344
        %v409 = vunpack.c.l.b16 %v345
        %v410 = vunpack.c.l.b16 %v346
        %v411 = vunpack.c.l.b16 %v347
        %v412 = vunpack.c.l.b16 %v348
        %v413 = vunpack.c.l.b16 %v349
        %v414 = vunpack.c.l.b16 %v350
        %v415 = vunpack.c.l.b16 %v351
        %v416 = vunpack.c.l.b16 %v352
        %v417 = vunpack.c.l.b16 %v353
        %v418 = vunpack.c.l.b16 %v354
        %v419 = vpack.c.b16 %v388, %v387
        %v420 = vpack.c.b16 %v390, %v389
        %v421 = vpack.c.b16 %v392, %v391
        %v422 = vpack.c.b16 %v394, %v393
        %v423 = vpack.c.b16 %v396, %v395
        %v424 = vpack.c.b16 %v398, %v397
        %v425 = vpack.c.b16 %v400, %v399
        %v426 = vpack.c.b16 %v402, %v401
        %v427 = vpack.c.b16 %v404, %v403
        %v428 = vpack.c.b16 %v406, %v405
        %v429 = vpack.c.b16 %v408, %v407
        %v430 = vpack.c.b16 %v410, %v409
        %v431 = vpack.c.b16 %v412, %v411
        %v432 = vpack.c.b16 %v414, %v413
        %v433 = vpack.c.b16 %v416, %v415
        %v434 = vpack.c.b16 %v418, %v417
        %451 = vmatprep.subr.bf16.mxu0 0
        %452 = vmatpush1.bf16.msra.mxu0 %v419
        %453 = vmatprep.subr.bf16.mxu0 0
        %454 = vmatpush1.bf16.msra.mxu0 %v420
        %455 = vmatprep.subr.bf16.mxu0 0
        %456 = vmatpush1.bf16.msra.mxu0 %v421
        %457 = vmatprep.subr.bf16.mxu0 0
        %458 = vmatpush1.bf16.msra.mxu0 %v422
        %459 = vmatprep.subr.bf16.mxu0 0
        %460 = vmatpush1.bf16.msra.mxu0 %v423
        %461 = vmatprep.subr.bf16.mxu0 0
        %462 = vmatpush1.bf16.msra.mxu0 %v424
        %463 = vmatprep.subr.bf16.mxu0 0
        %464 = vmatpush1.bf16.msra.mxu0 %v425
        %465 = vmatprep.subr.bf16.mxu0 0
        %466 = vmatpush1.bf16.msra.mxu0 %v426
        %467 = vmatprep.subr.bf16.mxu0 0
        %468 = vmatpush1.bf16.msra.mxu0 %v427
        %469 = vmatprep.subr.bf16.mxu0 0
        %470 = vmatpush1.bf16.msra.mxu0 %v428
        %471 = vmatprep.subr.bf16.mxu0 0
        %472 = vmatpush1.bf16.msra.mxu0 %v429
        %473 = vmatprep.subr.bf16.mxu0 0
        %474 = vmatpush1.bf16.msra.mxu0 %v430
        %475 = vmatprep.subr.bf16.mxu0 0
        %476 = vmatpush1.bf16.msra.mxu0 %v431
        %477 = vmatprep.subr.bf16.mxu0 0
        %478 = vmatpush1.bf16.msra.mxu0 %v432
        %479 = vmatprep.subr.bf16.mxu0 0
        %480 = vmatpush1.bf16.msra.mxu0 %v433
        %481 = vmatprep.subr.bf16.mxu0 0
        %482 = vmatpush1.bf16.msra.mxu0 %v434
        %483 = vmatprep.mubr.bf16.mxu0 %v321
        %484 = vmatmul.mubr.bf16.gmra.mrb[0].mxu0 %v317
        %v485 = vpop.f32.mrb[0].mxu0
        %v486 = vadd.f32 0.0, %v485
        %v487 = vpop.f32.mrb[0].mxu0
        %v488 = vpop.f32.mrb[0].mxu0
        %v489 = vadd.f32 0.0, %v488
        %v490 = vpop.f32.mrb[0].mxu0
        %491 = vdwg.mxu0
        %v492 = vld [vmem:[%s2] sm:$0x1]
        %v494 = vlaneseq
        %v495 = vshrl.u32 %v494, 7
        %v496 = vsub.s32 0, %v495
        %v497 = vrot.slane %v492, %v496
        %v499 = vmul.f32 %v486, %v497
        %v500 = vmul.f32 %v489, %v497
        %v501 = vld [vmem:[%s3] sm:$0x1]
        %v503 = vlaneseq
        %v504 = vshrl.u32 %v503, 7
        %v505 = vsub.s32 0, %v504
        %v506 = vrot.slane %v501, %v505
        %v508 = vadd.f32 %v499, %v506
        %v509 = vadd.f32 %v500, %v506
        %v510 = vmax.f32 %v508, 0.0
        %v511 = vmax.f32 %v509, 0.0
        %v512 = vld [vmem:[#allocation7] sm:$0xf]
        %v513 = vld [vmem:[#allocation7 + $0x4] sm:$0xf]
        %v514 = vld [vmem:[#allocation7 + $0x8] sm:$0xf]
        %v515 = vld [vmem:[#allocation7 + $0xc] sm:$0xf]
        %v516 = vld [vmem:[#allocation7 + $0x10] sm:$0xf]
        %v517 = vld [vmem:[#allocation7 + $0x14] sm:$0xf]
        %v518 = vld [vmem:[#allocation7 + $0x18] sm:$0xf]
        %v519 = vld [vmem:[#allocation7 + $0x1c] sm:$0xf]
        %v528 = vunpack.c.l.b16 %v512
        %v529 = vunpack.c.l.b16 %v513
        %v530 = vunpack.c.l.b16 %v514
        %v531 = vunpack.c.l.b16 %v515
        %v532 = vunpack.c.l.b16 %v516
        %v533 = vunpack.c.l.b16 %v517
        %v534 = vunpack.c.l.b16 %v518
        %v535 = vunpack.c.l.b16 %v519
        %v536 = vpack.c.b16 %v529, %v528
        %v537 = vpack.c.b16 %v531, %v530
        %v538 = vpack.c.b16 %v533, %v532
        %v539 = vpack.c.b16 %v535, %v534
        %v544 = vsel %vm315, %v279, 0
        %546 = vmatprep.subr.bf16.mxu0 0
        %547 = vmatpush1.bf16.msra.mxu0 %v536
        %548 = vmatprep.subr.bf16.mxu0 0
        %549 = vmatpush1.bf16.msra.mxu0 %v537
        %550 = vmatprep.subr.bf16.mxu0 0
        %551 = vmatpush1.bf16.msra.mxu0 %v538
        %552 = vmatprep.subr.bf16.mxu0 0
        %553 = vmatpush1.bf16.msra.mxu0 %v539
        %554 = vmatprep.subr.bf16.mxu0 0
        %555 = vmatpush1.bf16.msra.mxu0 0
        %556 = vmatprep.subr.bf16.mxu0 0
        %557 = vmatpush1.bf16.msra.mxu0 0
        %558 = vmatprep.subr.bf16.mxu0 0
        %559 = vmatpush1.bf16.msra.mxu0 0
        %560 = vmatprep.subr.bf16.mxu0 0
        %561 = vmatpush1.bf16.msra.mxu0 0
        %562 = vmatprep.subr.bf16.mxu0 0
        %563 = vmatpush1.bf16.msra.mxu0 0
        %564 = vmatprep.subr.bf16.mxu0 0
        %565 = vmatpush1.bf16.msra.mxu0 0
        %566 = vmatprep.subr.bf16.mxu0 0
        %567 = vmatpush1.bf16.msra.mxu0 0
        %568 = vmatprep.subr.bf16.mxu0 0
        %569 = vmatpush1.bf16.msra.mxu0 0
        %570 = vmatprep.subr.bf16.mxu0 0
        %571 = vmatpush1.bf16.msra.mxu0 0
        %572 = vmatprep.subr.bf16.mxu0 0
        %573 = vmatpush1.bf16.msra.mxu0 0
        %574 = vmatprep.subr.bf16.mxu0 0
        %575 = vmatpush1.bf16.msra.mxu0 0
        %576 = vmatprep.subr.bf16.mxu0 0
        %577 = vmatpush1.bf16.msra.mxu0 0
        %578 = vmatprep.mubr.bf16.mxu0 0
        %579 = vmatmul.mubr.bf16.gmra.mrb[0].mxu0 %v544
        %v580 = vpop.f32.mrb[0].mxu0
        %v581 = vadd.f32 0.0, %v580
        %v582 = vpop.f32.mrb[0].mxu0
        %v583 = vpop.f32.mrb[0].mxu0
        %v584 = vadd.f32 0.0, %v583
        %v585 = vpop.f32.mrb[0].mxu0
        %586 = vdwg.mxu0
        %v587 = vadd.f32 %v510, %v581
        %v588 = vadd.f32 %v511, %v584
        %v589 = vpack.c.bf16 %v588, %v587
        %v591 = vunpack.c.l.b16 %v589
        %v592 = vunpack.c.h.b16 %v589
        %v593 = vpack.c.b16 %v591, %v591
        %v594 = vpack.c.b16 %v592, %v592
        %597 = vst [vmem:[%s271] sm:$0xf] %v593
        %598 = vst [vmem:[%s271 + $0x4] sm:$0xf] %v594
        %s599 = sand.u32 %s141, 1
        %s600 = scalar_lea.sflag [#allocation4], %s599
        %s601 = sand.u32 %s141, 1
        %s602 = smul.addr %s601, 8
        %s603 = scalar_lea.vmem [#allocation8], %s602
        // Predicated region
        $region53: #{tpu_custom_call.1} parent=39 // pred_check
          %p604 = pneg %p151
        $region54: #{tpu_custom_call.1} parent=39 // pred_check_branch
          %606 = sbr.rel (%p604) target = $region56
        $region55: #{tpu_custom_call.1} parent=39 // pred_region
          %s608 = ssub.s32 128, 128
          %609 = vsyncadd %s600, %s608
          %s610 = smul.addr %s23, 2
          %s611 = smul.addr %s610, 64
          %s612 = scalar_lea.hbm %s5, %s611
          %s613 = sshll.u32 %s603, 4
          %s614 = int_to_ptr.vmem [resolvable:$true] %s613
          %619 = dma.vmem_to_hbm [thread:$0]  %s614, 128, %s612, %s600, 64, 64, 4
        $region56: #{tpu_custom_call.1} parent=39 // pred_fallthru
          _
      $region40: #{tpu_custom_call.1} parent=5 // pred_fallthru
        _
      %p620 = scmp.le.s32.totalorder 2, %s18
      // Predicated region
      $region57: #{tpu_custom_call.1} parent=5 // pred_check
        %p621 = pneg %p620
      $region58: #{tpu_custom_call.1} parent=5 // pred_check_branch
        %623 = sbr.rel (%p621) target = $region60
      $region59: #{tpu_custom_call.1} parent=5 // pred_region
        %s624 = ssub.s32 %s18, 2
        // Predicated region
        $region61: #{tpu_custom_call.1} parent=59 // pred_check
          %p625 = pneg %p157
        $region62: #{tpu_custom_call.1} parent=59 // pred_check_branch
          %627 = sbr.rel (%p625) target = $region64
        $region63: #{tpu_custom_call.1} parent=59 // pred_region
          %s628 = sand.u32 %s142, 1
          %s629 = scalar_lea.sflag [#allocation4], %s628
          %s630 = sand.u32 %s142, 1
          %s631 = smul.addr %s630, 8
          %s632 = scalar_lea.vmem [#allocation8], %s631
          %633 = dma.done %s629, 128
        $region64: #{tpu_custom_call.1} parent=59 // pred_fallthru
          _
      $region60: #{tpu_custom_call.1} parent=5 // pred_fallthru
        _
    $region6: #{tpu_custom_call.1} parent=1 // loop_footer
      %s22 = sadd.s32 1, %s18
    $region7: #{tpu_custom_call.1} parent=1 // loop_footer_branch
      %17 = sbr.rel target = $region3
    $region8: #{tpu_custom_call.1} parent=1 // loop_exit
      _
    %634 = vsyncpa [#allocation3], 1
    %s635 = scalar_lea.sflag [#allocation3], 1
    %636 = vsyncpa %s635, 1
    %637 = vsyncpa [#allocation6], 1
    %638 = vsyncpa [#allocation4], 1
    %s639 = scalar_lea.sflag [#allocation4], 1
    %640 = vsyncpa %s639, 1

</llo_original>
